<compile_context>
chip_gen: v5e
topology: v5e:2x2
jax: 0.10.0
libtpu: 0.0.40
codegen_flags: <defaults>
</compile_context>

<pallas_src>
import jax
import jax.numpy as jnp
import numpy as np
from jax import lax
from jax.experimental import pallas as pl
from jax.experimental.pallas import tpu as pltpu


def _round_up(a: int, b: int) -> int:
    return ((a + b - 1) // b) * b


def _vmem_budget_bytes() -> int:
    # Explicit scoped-VMEM limit for both pallas_calls. 48 MiB is safe on every generation
    # (v7x: 64 MiB physical per TC; v5e/v6e: 128 MiB physical but 16/32 MiB scoped default)
    # and leaves headroom over the ~4x-tile double-buffered footprint of the apply pass.
    # get_tpu_info only ever lowers it further.
    budget = 48 * 1024 * 1024
    try:
        cap = int(pltpu.get_tpu_info().vmem_capacity_bytes)
        budget = min(budget, (cap * 3) // 4)
    except Exception:
        pass
    return int(budget)


def _choose_tiles(B: int, C: int, HW: int, elem_budget: int):
    """Pick (block_b, block_hw): a lane-dense x tile of ~elem_budget f32 elements."""
    C_pad = _round_up(C, 8)
    if HW <= 128:
        block_hw = HW                                   # full last dim (always legal)
    else:
        MAX_CHUNKS = 64                                 # bounds the unrolled lane-fold loop
        lanes_budget = max(1, elem_budget // (C_pad * 128))
        block_hw = 128 * max(1, min(lanes_budget, MAX_CHUNKS, HW // 128))
    row_elems = C_pad * _round_up(block_hw, 128)
    block_b = int(max(1, min(B, elem_budget // row_elems)))
    return block_b, int(block_hw)


def _make_stats_kernel(B, HW, block_b, block_hw, lane, bt_per_par, ragged_b, ragged_hw):
    """Per-channel sum / sum-of-squares into resident (1, C, lane) partial accumulators."""
    n_chunks = block_hw // lane

    def kernel(x_ref, sum_ref, sumsq_ref):
        j = pl.program_id(1)        # batch-tile index within this parallel slice
        k = pl.program_id(2)        # hw-tile index

        @pl.when((j == 0) & (k == 0))
        def _init():
            sum_ref[...] = jnp.zeros_like(sum_ref)
            sumsq_ref[...] = jnp.zeros_like(sumsq_ref)

        x = x_ref[...]                                          # (block_b, C, block_hw)

        if ragged_b or ragged_hw:                               # static flags: only compiled
            mask = None                                         # in for ragged shapes
            if ragged_b:
                p = pl.program_id(0)
                b_start = (p * bt_per_par + j) * block_b
                rows = b_start + lax.broadcasted_iota(jnp.int32, (block_b, 1), 0)
                mask = (rows < B)[:, None, :]                   # (block_b, 1, 1)
            if ragged_hw:
                cols = k * block_hw + lax.broadcasted_iota(jnp.int32, (1, block_hw), 1)
                hw_ok = (cols < HW)[None]                       # (1, 1, block_hw)
                mask = hw_ok if mask is None else jnp.logical_and(mask, hw_ok)
            x = jnp.where(mask, x, 0.0)

        s1 = jnp.sum(x, axis=0)                                 # (C, block_hw): VPU adds
        s2 = jnp.sum(x * x, axis=0)                             # over batch rows (no XLU)
        p1 = s1[:, 0:lane]
        p2 = s2[:, 0:lane]
        for c in range(1, n_chunks):                            # lane-aligned chunk folds
            p1 = p1 + s1[:, c * lane:(c + 1) * lane]            # (pure VPU, 128-wide)
            p2 = p2 + s2[:, c * lane:(c + 1) * lane]
        sum_ref[...] += p1[None]
        sumsq_ref[...] += p2[None]

    return kernel


def _apply_kernel(scale_ref, shift_ref, x_ref, o_ref):
    # scale/shift: (C, 1) -- C on sublanes, broadcast along lanes is a cheap lane splat.
    o_ref[...] = x_ref[...] * scale_ref[...][None] + shift_ref[...][None]


def batchnorm2d_forward(x, weight, bias, running_mean, running_var,
                        num_batches_tracked, *, eps=1e-5, momentum=0.1,
                        block_b=None, block_hw=None):
    """Training-mode BatchNorm2d forward.

    Returns (y, new_running_mean, new_running_var, new_num_batches_tracked) -- the buffer
    updates are returned functionally (PyTorch mutates them in place).
    """
    assert x.ndim == 4
    B, C, H, W = x.shape
    HW = H * W
    x = x.astype(jnp.float32)
    x3 = x.reshape(B, C, HW)                  # free, row-major (matches NCHW memory order)

    vmem_budget = _vmem_budget_bytes()
    elem_budget = vmem_budget // (5 * 4)      # ~budget/5 bytes per x tile, f32 elements
    auto_b, auto_hw = _choose_tiles(B, C, HW, elem_budget)
    block_b = int(min(B, auto_b if block_b is None else block_b))
    block_hw = int(min(HW, auto_hw if block_hw is None else block_hw))
    assert block_hw == HW or block_hw % 128 == 0
    lane = 128 if block_hw % 128 == 0 else block_hw   # accumulator lane width

    num_b_tiles = pl.cdiv(B, block_b)
    num_hw_tiles = pl.cdiv(HW, block_hw)

    # v7x megacore: split batch tiles across the two TensorCores for the reduction pass
    # (harmless serial loop on 1-TC chips).
    num_par = 2 if num_b_tiles >= 2 else 1
    bt_per_par = -(-num_b_tiles // num_par)
    overrun = num_par * bt_per_par > num_b_tiles          # odd tile count: one clamped tile
    ragged_b = (B % block_b != 0) or overrun
    ragged_hw = (HW % block_hw != 0)

    if overrun:
        def x1_map(p, j, k):
            return (jnp.minimum(p * bt_per_par + j, num_b_tiles - 1), 0, k)
    else:
        def x1_map(p, j, k):
            return (p * bt_per_par + j, 0, k)

    acc_spec = pl.BlockSpec((1, C, lane), lambda p, j, k: (p, 0, 0))

    # ---- pass 1: per-channel lane-partial sum / sum-of-squares (grid reduction) ----
    sums, sumsqs = pl.pallas_call(
        _make_stats_kernel(B, HW, block_b, block_hw, lane, bt_per_par,
                           ragged_b, ragged_hw),
        out_shape=(jax.ShapeDtypeStruct((num_par, C, lane), jnp.float32),
                   jax.ShapeDtypeStruct((num_par, C, lane), jnp.float32)),
        grid=(num_par, bt_per_par, num_hw_tiles),
        in_specs=[pl.BlockSpec((block_b, C, block_hw), x1_map)],
        out_specs=(acc_spec, acc_spec),
        compiler_params=pltpu.CompilerParams(
            dimension_semantics=("parallel", "arbitrary", "arbitrary"),
            vmem_limit_bytes=vmem_budget),
    )(x3)

    # ---- tiny per-channel finalize (C elements): plain JAX glue ----
    n = jnp.float32(B * HW)                                  # true count (padding masked out)
    mean = jnp.sum(sums, axis=(0, 2)) / n                    # (C,)
    var = jnp.maximum(jnp.sum(sumsqs, axis=(0, 2)) / n - mean * mean, 0.0)  # biased variance
    inv = 1.0 / (jnp.sqrt(var) + eps)                        # eps OUTSIDE sqrt, per reference
    scale_c = weight * inv                                   # (C,)
    shift_c = bias - mean * scale_c                          # (C,)

    # ---- pass 2: y = scale_c * x + shift_c (elementwise, fully parallel) ----
    vec_spec = pl.BlockSpec((C, 1), lambda i, k: (0, 0))
    x2_spec = pl.BlockSpec((block_b, C, block_hw), lambda i, k: (i, 0, k))
    y3 = pl.pallas_call(
        _apply_kernel,
        out_shape=jax.ShapeDtypeStruct((B, C, HW), jnp.float32),
        grid=(num_b_tiles, num_hw_tiles),
        in_specs=[vec_spec, vec_spec, x2_spec],
        out_specs=x2_spec,
        compiler_params=pltpu.CompilerParams(
            dimension_semantics=("parallel", "parallel"),
            vmem_limit_bytes=vmem_budget),
    )(scale_c.reshape(C, 1), shift_c.reshape(C, 1), x3)

    y = y3.reshape(B, C, H, W)

    # Buffer updates (reference uses the biased batch variance for running_var as well).
    new_running_mean = (1.0 - momentum) * running_mean + momentum * mean
    new_running_var = (1.0 - momentum) * running_var + momentum * var
    new_num_batches_tracked = num_batches_tracked + 1
    # TODO(synk): the module's eval branch `(x - running_mean) / running_var` is dead code
    # (self.train is a bound method, always truthy), so only training-mode math is implemented.
    return y, new_running_mean, new_running_var, new_num_batches_tracked


def _ref_forward(x, weight, bias, running_mean, running_var, eps, momentum):
    mean = x.mean(axis=(0, 2, 3))
    var = x.var(axis=(0, 2, 3))                              # ddof=0 == unbiased=False
    xn = (x - mean[None, :, None, None]) / (jnp.sqrt(var)[None, :, None, None] + eps)
    y = weight[None, :, None, None] * xn + bias[None, :, None, None]
    rm = (1 - momentum) * running_mean + momentum * mean
    rv = (1 - momentum) * running_var + momentum * var
    return y, rm, rv


if __name__ == "__main__":
    key = jax.random.PRNGKey(0)
    kx, kw, kb = jax.random.split(key, 3)
    eps, momentum = 1e-5, 0.1

    # --- primary case (shapes consistent with the module) ---
    B, C, H, W = 2, 4, 16, 16
    x = jax.random.normal(kx, (B, C, H, W), jnp.float32)
    weight = jax.random.uniform(kw, (C,), jnp.float32, 0.5, 1.5)
    bias = jax.random.uniform(kb, (C,), jnp.float32, -0.5, 0.5)
    running_mean = jnp.zeros((C,), jnp.float32)
    running_var = jnp.ones((C,), jnp.float32)
    nbt = jnp.array(0, jnp.int32)

    y, rm, rv, nbt1 = batchnorm2d_forward(
        x, weight, bias, running_mean, running_var, nbt, eps=eps, momentum=momentum)
    y = jax.block_until_ready(y)

    ry, rrm, rrv = _ref_forward(x, weight, bias, running_mean, running_var, eps, momentum)
    np.testing.assert_allclose(np.asarray(y), np.asarray(ry), rtol=1e-5, atol=1e-5)
    np.testing.assert_allclose(np.asarray(rm), np.asarray(rrm), rtol=1e-5, atol=1e-6)
    np.testing.assert_allclose(np.asarray(rv), np.asarray(rrv), rtol=1e-5, atol=1e-6)
    assert int(nbt1) == 1
    assert y.shape == (B, C, H, W) and y.dtype == jnp.float32

    # --- ragged / multi-tile case: forces masked reduction, clamped overrun tile, and
    #     partial writeback paths (small forced blocks just to exercise the tiling). ---
    B2, C2, H2, W2 = 5, 4, 12, 12
    x2 = jax.random.normal(jax.random.PRNGKey(1), (B2, C2, H2, W2), jnp.float32)
    w2 = jnp.linspace(0.5, 1.5, C2, dtype=jnp.float32)
    b2 = jnp.linspace(-0.3, 0.3, C2, dtype=jnp.float32)
    rm2 = jnp.zeros((C2,), jnp.float32)
    rv2 = jnp.ones((C2,), jnp.float32)

    y2, nrm2, nrv2, _ = batchnorm2d_forward(
        x2, w2, b2, rm2, rv2, jnp.array(0, jnp.int32),
        eps=eps, momentum=momentum, block_b=2, block_hw=128)
    y2 = jax.block_until_ready(y2)

    ry2, rrm2, rrv2 = _ref_forward(x2, w2, b2, rm2, rv2, eps, momentum)
    np.testing.assert_allclose(np.asarray(y2), np.asarray(ry2), rtol=1e-5, atol=1e-5)
    np.testing.assert_allclose(np.asarray(nrm2), np.asarray(rrm2), rtol=1e-5, atol=1e-6)
    np.testing.assert_allclose(np.asarray(nrv2), np.asarray(rrv2), rtol=1e-5, atol=1e-6)

    print("KERNEL_OK")
</pallas_src>

<mosaic_0001>
module attributes {stable_mosaic.version = 11 : i64} {
  func.func @kernel(%arg0: i32, %arg1: i32, %arg2: i32, %arg3: memref<2x4x256xf32, #tpu.memory_space<vmem>>, %arg4: memref<1x4x128xf32, #tpu.memory_space<vmem>>, %arg5: memref<1x4x128xf32, #tpu.memory_space<vmem>>) attributes {dimension_semantics = [#tpu.dimension_semantics<parallel>, #tpu.dimension_semantics<arbitrary>, #tpu.dimension_semantics<arbitrary>], iteration_bounds = array<i64: 1, 1, 1>, scalar_prefetch = 0 : i64, scratch_operands = 0 : i64, tpu.core_type = #tpu.core_type<tc>, window_params = [{transform_indices = @transform_0, window_bounds = array<i64: 2, 4, 256>}, {transform_indices = @transform_1, window_bounds = array<i64: 1, 4, 128>}, {transform_indices = @transform_2, window_bounds = array<i64: 1, 4, 128>}]} {
    %c0_i32 = arith.constant 0 : i32
    %0 = arith.cmpi eq, %arg1, %c0_i32 : i32
    %c0_i32_0 = arith.constant 0 : i32
    %1 = arith.cmpi eq, %arg2, %c0_i32_0 : i32
    %2 = arith.andi %0, %1 : i1
    %3 = arith.extui %2 : i1 to i32
    %c0_i32_1 = arith.constant 0 : i32
    %4 = arith.cmpi ne, %3, %c0_i32_1 : i32
    scf.if %4 {
      %cst_17 = arith.constant 0.000000e+00 : f32
      %23 = vector.broadcast %cst_17 : f32 to vector<1x4x128xf32>
      %c0_18 = arith.constant 0 : index
      %c0_19 = arith.constant 0 : index
      %c0_20 = arith.constant 0 : index
      %24 = vector.load %arg4[%c0_18, %c0_19, %c0_20] : memref<1x4x128xf32, #tpu.memory_space<vmem>>, vector<1x4x128xf32>
      tpu.vector_store %arg4[%c0_18, %c0_19, %c0_20], %23 {strides = array<i32>} : memref<1x4x128xf32, #tpu.memory_space<vmem>>, vector<1x4x128xf32>,
      %cst_21 = arith.constant 0.000000e+00 : f32
      %25 = vector.broadcast %cst_21 : f32 to vector<1x4x128xf32>
      %c0_22 = arith.constant 0 : index
      %c0_23 = arith.constant 0 : index
      %c0_24 = arith.constant 0 : index
      %26 = vector.load %arg5[%c0_22, %c0_23, %c0_24] : memref<1x4x128xf32, #tpu.memory_space<vmem>>, vector<1x4x128xf32>
      tpu.vector_store %arg5[%c0_22, %c0_23, %c0_24], %25 {strides = array<i32>} : memref<1x4x128xf32, #tpu.memory_space<vmem>>, vector<1x4x128xf32>,
    } else {
    }
    %c0 = arith.constant 0 : index
    %c0_2 = arith.constant 0 : index
    %c0_3 = arith.constant 0 : index
    %5 = vector.load %arg3[%c0, %c0_2, %c0_3] : memref<2x4x256xf32, #tpu.memory_space<vmem>>, vector<2x4x256xf32>
    %cst = arith.constant dense<0.000000e+00> : vector<4x256xf32>
    %6 = vector.multi_reduction <add>, %5, %cst [0] : vector<2x4x256xf32> to vector<4x256xf32>
    %7 = arith.mulf %5, %5 : vector<2x4x256xf32>
    %cst_4 = arith.constant dense<0.000000e+00> : vector<4x256xf32>
    %8 = vector.multi_reduction <add>, %7, %cst_4 [0] : vector<2x4x256xf32> to vector<4x256xf32>
    %9 = vector.extract_strided_slice %6 {offsets = [0, 0], sizes = [4, 128], strides = [1, 1]} : vector<4x256xf32> to vector<4x128xf32>
    %10 = vector.extract_strided_slice %8 {offsets = [0, 0], sizes = [4, 128], strides = [1, 1]} : vector<4x256xf32> to vector<4x128xf32>
    %11 = vector.extract_strided_slice %6 {offsets = [0, 128], sizes = [4, 128], strides = [1, 1]} : vector<4x256xf32> to vector<4x128xf32>
    %12 = arith.addf %9, %11 : vector<4x128xf32>
    %13 = vector.extract_strided_slice %8 {offsets = [0, 128], sizes = [4, 128], strides = [1, 1]} : vector<4x256xf32> to vector<4x128xf32>
    %14 = arith.addf %10, %13 : vector<4x128xf32>
    %c0_5 = arith.constant 0 : index
    %c0_6 = arith.constant 0 : index
    %c0_7 = arith.constant 0 : index
    %15 = vector.load %arg4[%c0_5, %c0_6, %c0_7] : memref<1x4x128xf32, #tpu.memory_space<vmem>>, vector<1x4x128xf32>
    %16 = vector.shape_cast %12 : vector<4x128xf32> to vector<1x4x128xf32>
    %17 = arith.addf %15, %16 : vector<1x4x128xf32>
    %c0_8 = arith.constant 0 : index
    %c0_9 = arith.constant 0 : index
    %c0_10 = arith.constant 0 : index
    %18 = vector.load %arg4[%c0_8, %c0_9, %c0_10] : memref<1x4x128xf32, #tpu.memory_space<vmem>>, vector<1x4x128xf32>
    tpu.vector_store %arg4[%c0_8, %c0_9, %c0_10], %17 {strides = array<i32>} : memref<1x4x128xf32, #tpu.memory_space<vmem>>, vector<1x4x128xf32>,
    %c0_11 = arith.constant 0 : index
    %c0_12 = arith.constant 0 : index
    %c0_13 = arith.constant 0 : index
    %19 = vector.load %arg5[%c0_11, %c0_12, %c0_13] : memref<1x4x128xf32, #tpu.memory_space<vmem>>, vector<1x4x128xf32>
    %20 = vector.shape_cast %14 : vector<4x128xf32> to vector<1x4x128xf32>
    %21 = arith.addf %19, %20 : vector<1x4x128xf32>
    %c0_14 = arith.constant 0 : index
    %c0_15 = arith.constant 0 : index
    %c0_16 = arith.constant 0 : index
    %22 = vector.load %arg5[%c0_14, %c0_15, %c0_16] : memref<1x4x128xf32, #tpu.memory_space<vmem>>, vector<1x4x128xf32>
    tpu.vector_store %arg5[%c0_14, %c0_15, %c0_16], %21 {strides = array<i32>} : memref<1x4x128xf32, #tpu.memory_space<vmem>>, vector<1x4x128xf32>,
    return
  }
  func.func @transform_0(%arg0: i32, %arg1: i32, %arg2: i32) -> (i32, i32, i32) {
    %c1_i32 = arith.constant 1 : i32
    %0 = arith.muli %arg0, %c1_i32 : i32
    %1 = arith.addi %0, %arg1 : i32
    %c0_i32 = arith.constant 0 : i32
    %c0_i32_0 = arith.constant 0 : i32
    return %1, %c0_i32, %arg2 : i32, i32, i32
  }
  func.func @transform_1(%arg0: i32, %arg1: i32, %arg2: i32) -> (i32, i32, i32) {
    %c0_i32 = arith.constant 0 : i32
    %c0_i32_0 = arith.constant 0 : i32
    %c0_i32_1 = arith.constant 0 : i32
    return %arg0, %c0_i32, %c0_i32_0 : i32, i32, i32
  }
  func.func @transform_2(%arg0: i32, %arg1: i32, %arg2: i32) -> (i32, i32, i32) {
    %c0_i32 = arith.constant 0 : i32
    %c0_i32_0 = arith.constant 0 : i32
    %c0_i32_1 = arith.constant 0 : i32
    return %arg0, %c0_i32, %c0_i32_0 : i32, i32, i32
  }
}

</mosaic_0001>

<llo_original>
// kernel: tpu_custom_call.1
$region0: #{tpu_custom_call.1}
  #allocation0 [shape = 'u32[]', space=smem, size = 0x4, offset = 0x4, fixed_abs, tag = 'smem constant byte address 0x4 - core index']
  #allocation1 [shape = 'u32[72,128]{1,0:T(1,128)}', space=vmem, size = 0x9000, scoped, tag = 'internal scratch']
  %s0 = inlined_call_operand.hbm [shape: f32[2,4,256], index: 0, kind: input, shape index: {}]
  %s1 = inlined_call_operand.hbm [shape: f32[1,4,128], index: 1, kind: output, shape index: {0}]
  %s2 = inlined_call_operand.hbm [shape: f32[1,4,128], index: 2, kind: output, shape index: {1}]
  %3 = xla_tuple %s1, %s2
  %s4 = sld [smem:[#allocation0]]
  $region30: #{tpu_custom_call.1} parent=0
    _
  %s6 = ssub.s32 1, %s4
  %s7 = scalar_select 0, %s6, %s4
  $region1: #{tpu_custom_call.1} parent=0
    #allocation2 [shape = 'u8[8192]{0}', space=vmem, size = 0x2000, scoped, tag = 'input window, operand 0, single buffered']
    #allocation3 [shape = 's32[1]{0}', space=sflag, size = 0x4, scoped, tag = 'scoped memory for tpu_custom_call.1']
    #allocation4 [shape = 's32[1]{0}', space=sflag, size = 0x4, scoped, tag = 'scoped memory for tpu_custom_call.1']
    #allocation5 [shape = 'u8[2048]{0}', space=vmem, size = 0x800, scoped, tag = 'output window, operand 0, single buffered']
    #allocation6 [shape = 'u8[2048]{0}', space=vmem, size = 0x800, scoped, tag = 'output window, operand 1, single buffered']
    #allocation7 [shape = 's32[1]{0}', space=sflag, size = 0x4, scoped, tag = 'scoped memory for tpu_custom_call.1']
    %8 = vsyncpa [#allocation3], 0
    %9 = vsyncpa [#allocation4], 0
    %10 = vsyncpa [#allocation7], 0
    // Predicated region
    $region2: #{tpu_custom_call.1} parent=1 // pred_check
      _
    $region3: #{tpu_custom_call.1} parent=1 // pred_check_branch
      %12 = sbr.rel (0) target = $region5
    $region4: #{tpu_custom_call.1} parent=1 // pred_region
      %s13 = sadd.s32 0, 0
      %s14 = smul.u32 2, %s13
      %16 = vsyncadd [#allocation3], 0
      %s17 = smul.addr %s14, 2
      %s18 = smul.addr %s17, 4
      %s19 = scalar_lea.hbm %s0, %s18
      %s20 = sshll.u32 %s19, 4
      %s21 = int_to_ptr.hbm [resolvable:$true] %s20
      %s22 = sshll.u32 [#allocation2], 4
      %s23 = int_to_ptr.vmem [resolvable:$true] %s22
      %28 = dma.hbm_to_vmem [thread:$0]  %s21, 256, %s23, [#allocation3], 128, 128, 8
    $region5: #{tpu_custom_call.1} parent=1 // pred_fallthru
      _
    // Predicated region
    $region6: #{tpu_custom_call.1} parent=1 // pred_check
      _
    $region7: #{tpu_custom_call.1} parent=1 // pred_check_branch
      %30 = sbr.rel (0) target = $region9
    $region8: #{tpu_custom_call.1} parent=1 // pred_region
      %32 = dma.done [#allocation3], 256
    $region9: #{tpu_custom_call.1} parent=1 // pred_fallthru
      _
    %s33 = sadd.s32 0, 0
    %s34 = smul.u32 2, %s33
    %p35 = scmp.eq.s32.totalorder 0, 0
    %p36 = scmp.eq.s32.totalorder 0, 0
    %p37 = pnand %p35, %p36
    %p38 = pneg %p37
    // Predicated region
    $region10: #{tpu_custom_call.1} parent=1 // pred_check
      _
    $region11: #{tpu_custom_call.1} parent=1 // pred_check_branch
      %40 = sbr.rel (%p37) target = $region13
    $region12: #{tpu_custom_call.1} parent=1 // pred_region
      %41 = vst [vmem:[#allocation5] sm:$0xf] 0.0
      %42 = vst [vmem:[#allocation6] sm:$0xf] 0.0
    $region13: #{tpu_custom_call.1} parent=1 // pred_fallthru
      _
    %v43 = vld [vmem:[#allocation2] sm:$0xff]
    %v44 = vld [vmem:[#allocation2 + $0x8] sm:$0xff]
    %47 = vst [vmem:[#allocation1] ss:$2 sm:$0xff] %v43
    %v48 = vld.sshfl [vmem:[#allocation1] sm:$0xff pattern:$0x75316420]
    %v49 = vld.sshfl [vmem:[#allocation1 + $0x8] sm:$0xff pattern:$0x75316420]
    %s50 = scalar_lea.vmem [#allocation1], 16
    %51 = vst [vmem:[%s50] ss:$2 sm:$0xff] %v44
    %v52 = vld.sshfl [vmem:[#allocation1 + $0x10] sm:$0xff pattern:$0x75316420]
    %v53 = vld.sshfl [vmem:[#allocation1 + $0x18] sm:$0xff pattern:$0x75316420]
    %vm58 = vcmask 1043456
    %v59 = vsel %vm58, %v48, 0.0
    %v60 = vsel %vm58, %v52, 0.0
    %v61 = vadd.f32 %v59, %v60
    %v62 = vsel %vm58, %v49, 0.0
    %v63 = vsel %vm58, %v53, 0.0
    %v64 = vadd.f32 %v62, %v63
    %v65 = vmul.f32 %v43, %v43
    %v66 = vmul.f32 %v44, %v44
    %69 = vst [vmem:[#allocation1] ss:$2 sm:$0xff] %v65
    %v70 = vld.sshfl [vmem:[#allocation1] sm:$0xff pattern:$0x75316420]
    %v71 = vld.sshfl [vmem:[#allocation1 + $0x8] sm:$0xff pattern:$0x75316420]
    %s72 = scalar_lea.vmem [#allocation1], 16
    %73 = vst [vmem:[%s72] ss:$2 sm:$0xff] %v66
    %v74 = vld.sshfl [vmem:[#allocation1 + $0x10] sm:$0xff pattern:$0x75316420]
    %v75 = vld.sshfl [vmem:[#allocation1 + $0x18] sm:$0xff pattern:$0x75316420]
    %v80 = vsel %vm58, %v70, 0.0
    %v81 = vsel %vm58, %v74, 0.0
    %v82 = vadd.f32 %v80, %v81
    %v83 = vsel %vm58, %v71, 0.0
    %v84 = vsel %vm58, %v75, 0.0
    %v85 = vadd.f32 %v83, %v84
    %v86 = vadd.f32 %v61, %v64
    %v87 = vadd.f32 %v82, %v85
    %v88 = vld [vmem:[#allocation5] sm:$0xf]
    %v89 = vadd.f32 %v88, %v86
    %90 = vst [vmem:[#allocation5] sm:$0xf] %v89
    %v91 = vld [vmem:[#allocation6] sm:$0xf]
    %v92 = vadd.f32 %v91, %v87
    %93 = vst [vmem:[#allocation6] sm:$0xf] %v92
    // Predicated region
    $region14: #{tpu_custom_call.1} parent=1 // pred_check
      _
    $region15: #{tpu_custom_call.1} parent=1 // pred_check_branch
      %95 = sbr.rel (0) target = $region17
    $region16: #{tpu_custom_call.1} parent=1 // pred_region
      %97 = vsyncadd [#allocation4], 0
      %s99 = sshll.u32 [#allocation5], 4
      %s100 = int_to_ptr.vmem [resolvable:$true] %s99
      %s101 = sshll.u32 %s1, 4
      %s102 = int_to_ptr.hbm [resolvable:$true] %s101
      %104 = dma.vmem_to_hbm [thread:$0]  %s100, 64, %s102, [#allocation4]
    $region17: #{tpu_custom_call.1} parent=1 // pred_fallthru
      _
    // Predicated region
    $region18: #{tpu_custom_call.1} parent=1 // pred_check
      _
    $region19: #{tpu_custom_call.1} parent=1 // pred_check_branch
      %106 = sbr.rel (0) target = $region21
    $region20: #{tpu_custom_call.1} parent=1 // pred_region
      %108 = vsyncadd [#allocation7], 0
      %s110 = sshll.u32 [#allocation6], 4
      %s111 = int_to_ptr.vmem [resolvable:$true] %s110
      %s112 = sshll.u32 %s2, 4
      %s113 = int_to_ptr.hbm [resolvable:$true] %s112
      %115 = dma.vmem_to_hbm [thread:$0]  %s111, 64, %s113, [#allocation7]
    $region21: #{tpu_custom_call.1} parent=1 // pred_fallthru
      _
    // Predicated region
    $region22: #{tpu_custom_call.1} parent=1 // pred_check
      _
    $region23: #{tpu_custom_call.1} parent=1 // pred_check_branch
      %117 = sbr.rel (0) target = $region25
    $region24: #{tpu_custom_call.1} parent=1 // pred_region
      %119 = dma.done [#allocation4], 64
    $region25: #{tpu_custom_call.1} parent=1 // pred_fallthru
      _
    // Predicated region
    $region26: #{tpu_custom_call.1} parent=1 // pred_check
      _
    $region27: #{tpu_custom_call.1} parent=1 // pred_check_branch
      %121 = sbr.rel (0) target = $region29
    $region28: #{tpu_custom_call.1} parent=1 // pred_region
      %123 = dma.done [#allocation7], 64
    $region29: #{tpu_custom_call.1} parent=1 // pred_fallthru
      _
    %124 = vsyncpa [#allocation3], 1
    %125 = vsyncpa [#allocation4], 1
    %126 = vsyncpa [#allocation7], 1

</llo_original>
